<compile_context>
chip_gen: v6e
topology: v6e:2x2x1
jax: 0.10.0
libtpu: 0.0.40
codegen_flags: <defaults>
</compile_context>

<pallas_src>
import jax
import jax.numpy as jnp
from jax.experimental import pallas as pl
from jax.experimental.pallas import tpu as pltpu


def _round_up(x, m):
    return (x + m - 1) // m * m


def make_position_table(seq_len, embedding_size, dtype=jnp.float32):
    """Sinusoidal position embeddings, matching get_position_embedding()."""
    positions = jnp.arange(1, seq_len + 1, dtype=jnp.float32)[:, None]        # (S, 1)
    bins = (2.0 * jnp.arange(embedding_size // 2, dtype=jnp.float32))[None]   # (1, E//2)
    angles = positions * (1.0 / jnp.power(10000.0, bins / embedding_size))    # (S, E//2)
    pos = jnp.stack([jnp.sin(angles), jnp.cos(angles)], axis=2)               # (S, E//2, 2)
    return pos.reshape(seq_len, embedding_size).astype(dtype)                 # interleaved sin/cos


def _make_kernel(ts, s_pad):
    """Kernel over one (batch b, sequence-tile t) step: gather TS rows + add pos."""
    unroll = ts <= 32  # short fixed loops: give the LLO scheduler visibility

    def kernel(ids_ref, word_ref, pos_ref, out_ref):
        # ids_ref : (B*S_pad,) int32 in SMEM (scalar prefetch, flattened).
        # word_ref: (V, E_pad)   VMEM-resident embedding table (constant index).
        # pos_ref : (TS, E_pad)  position rows for this sequence tile.
        # out_ref : (1, TS, E_pad)
        t = pl.program_id(0)
        b = pl.program_id(1)
        base = b * s_pad + t * ts

        def body(i, carry):
            tok = ids_ref[base + i]                                # scalar SMEM read
            out_ref[0, pl.ds(i, 1), :] = (
                word_ref[pl.ds(tok, 1), :] + pos_ref[pl.ds(i, 1), :]
            )
            return carry

        jax.lax.fori_loop(0, ts, body, 0, unroll=unroll)

    return kernel


def embeddings_forward(input_ids, word_embedding_table, *, tile_tokens=128):
    B, S = input_ids.shape
    V, E = word_embedding_table.shape
    dtype = word_embedding_table.dtype
    itemsize = jnp.dtype(dtype).itemsize

    # ---- tiling / padding --------------------------------------------------
    E_pad = _round_up(E, 128)                       # lane-dense blocks
    TS = min(tile_tokens, _round_up(S, 8))          # tokens per grid step
    TS = _round_up(TS, 8)                           # sublane-dense blocks
    S_pad = _round_up(S, TS)
    S_tiles = S_pad // TS

    # ---- operand prep ------------------------------------------------------
    # Clamp ids (matches JAX gather semantics; avoids OOB rows). Pad tokens to
    # the tile boundary with id 0 (garbage rows are sliced off at the end).
    ids = jnp.clip(input_ids.astype(jnp.int32), 0, V - 1)
    ids = jnp.pad(ids, ((0, 0), (0, S_pad - S)))
    ids_flat = ids.reshape(-1)                      # 1-D -> cheap SMEM layout

    table = jnp.pad(word_embedding_table, ((0, 0), (0, E_pad - E)))
    pos = make_position_table(S, E, dtype)
    pos = jnp.pad(pos, ((0, S_pad - S), (0, E_pad - E)))

    # ---- VMEM budget (resident-table path) ---------------------------------
    table_bytes = V * E_pad * itemsize
    if 2 * table_bytes > 40 * 1024 * 1024:          # stay well under v7x 64 MiB/TC
        # TODO(synk): large-vocab manual per-row DMA gather path.
        raise NotImplementedError(
            "word-embedding table too large for the VMEM-resident gather path")

    est_vmem = 2 * table_bytes + 4 * TS * E_pad * itemsize + (1 << 20)
    cp_kwargs = dict(dimension_semantics=("parallel", "parallel"))
    if est_vmem > 16 * 1024 * 1024:                 # above v5e default scoped VMEM
        cp_kwargs["vmem_limit_bytes"] = int(min(est_vmem + (8 << 20),
                                                60 * 1024 * 1024))

    # ---- pallas_call --------------------------------------------------------
    grid_spec = pltpu.PrefetchScalarGridSpec(
        num_scalar_prefetch=1,                      # ids -> SMEM
        grid=(S_tiles, B),                          # batch innermost: pos tile reused
        in_specs=[
            # Whole table, constant block index -> fetched once, VMEM-resident.
            pl.BlockSpec((V, E_pad), lambda t, b, ids: (0, 0)),
            # Position rows for this sequence tile (independent of b).
            pl.BlockSpec((TS, E_pad), lambda t, b, ids: (t, 0)),
        ],
        out_specs=pl.BlockSpec((1, TS, E_pad), lambda t, b, ids: (b, t, 0)),
    )

    out = pl.pallas_call(
        _make_kernel(TS, S_pad),
        out_shape=jax.ShapeDtypeStruct((B, S_pad, E_pad), dtype),
        grid_spec=grid_spec,
        compiler_params=pltpu.CompilerParams(**cp_kwargs),
    )(ids_flat, table, pos)

    # Eval-mode dropout is the identity.
    return out[:, :S, :E]


def reference_forward(input_ids, word_embedding_table):
    """Pure-JAX reference mirroring the PyTorch forward (eval mode)."""
    _, S = input_ids.shape
    _, E = word_embedding_table.shape
    pos = make_position_table(S, E, word_embedding_table.dtype)
    return word_embedding_table[input_ids] + pos[None]


if __name__ == "__main__":
    key = jax.random.PRNGKey(0)
    k_ids, k_tab = jax.random.split(key)

    B, S = 2, 8        # batch, sequence length
    V, E = 64, 32      # vocab_size, embedding_size (even, as the module assumes)

    input_ids = jax.random.randint(k_ids, (B, S), 0, V, dtype=jnp.int32)
    # nn.Embedding default init ~ N(0, 1)
    word_table = jax.random.normal(k_tab, (V, E), dtype=jnp.float32)

    out = embeddings_forward(input_ids, word_table)
    out = jax.block_until_ready(out)

    ref = reference_forward(input_ids, word_table)
    assert out.shape == (B, S, E)
    assert jnp.allclose(out, ref, atol=1e-5, rtol=1e-5), "mismatch vs reference"

    print("KERNEL_OK")
</pallas_src>

<mosaic_0001>
module attributes {stable_mosaic.version = 11 : i64} {
  func.func @kernel(%arg0: i32, %arg1: i32, %arg2: memref<16xi32, #tpu.memory_space<smem>>, %arg3: memref<64x128xf32, #tpu.memory_space<vmem>>, %arg4: memref<8x128xf32, #tpu.memory_space<vmem>>, %arg5: memref<1x8x128xf32, #tpu.memory_space<vmem>>) attributes {dimension_semantics = [#tpu.dimension_semantics<parallel>, #tpu.dimension_semantics<parallel>], iteration_bounds = array<i64: 1, 2>, scalar_prefetch = 1 : i64, scratch_operands = 0 : i64, tpu.core_type = #tpu.core_type<tc>, window_params = [{pipeline_mode = #tpu.pipeline_mode<synchronous>, transform_indices = @transform_0, window_bounds = array<i64: 64, 128>}, {transform_indices = @transform_1, window_bounds = array<i64: 8, 128>}, {transform_indices = @transform_2, window_bounds = array<i64: 1, 8, 128>}]} {
    %c8_i32 = arith.constant 8 : i32
    %0 = arith.muli %arg1, %c8_i32 : i32
    %c8_i32_0 = arith.constant 8 : i32
    %1 = arith.muli %arg0, %c8_i32_0 : i32
    %2 = arith.addi %0, %1 : i32
    %c0_i32 = arith.constant 0 : i32
    %3 = arith.addi %2, %c0_i32 : i32
    %4 = arith.index_cast %3 : i32 to index
    %5 = memref.load %arg2[%4] : memref<16xi32, #tpu.memory_space<smem>>
    %6 = arith.index_cast %5 : i32 to index
    %c0 = arith.constant 0 : index
    %7 = vector.load %arg3[%6, %c0] : memref<64x128xf32, #tpu.memory_space<vmem>>, vector<1x128xf32>
    %8 = arith.index_cast %c0_i32 : i32 to index
    %c0_1 = arith.constant 0 : index
    %9 = vector.load %arg4[%8, %c0_1] : memref<8x128xf32, #tpu.memory_space<vmem>>, vector<1x128xf32>
    %10 = arith.addf %7, %9 : vector<1x128xf32>
    %c0_2 = arith.constant 0 : index
    %11 = arith.index_cast %c0_i32 : i32 to index
    %c0_3 = arith.constant 0 : index
    %12 = vector.load %arg5[%c0_2, %11, %c0_3] : memref<1x8x128xf32, #tpu.memory_space<vmem>>, vector<1x1x128xf32>
    %13 = vector.shape_cast %12 : vector<1x1x128xf32> to vector<1x128xf32>
    %14 = vector.shape_cast %10 : vector<1x128xf32> to vector<1x1x128xf32>
    tpu.vector_store %arg5[%c0_2, %11, %c0_3], %14 {strides = array<i32>} : memref<1x8x128xf32, #tpu.memory_space<vmem>>, vector<1x1x128xf32>,
    %c1_i32 = arith.constant 1 : i32
    %15 = arith.addi %2, %c1_i32 : i32
    %16 = arith.index_cast %15 : i32 to index
    %17 = memref.load %arg2[%16] : memref<16xi32, #tpu.memory_space<smem>>
    %18 = arith.index_cast %17 : i32 to index
    %c0_4 = arith.constant 0 : index
    %19 = vector.load %arg3[%18, %c0_4] : memref<64x128xf32, #tpu.memory_space<vmem>>, vector<1x128xf32>
    %20 = arith.index_cast %c1_i32 : i32 to index
    %c0_5 = arith.constant 0 : index
    %21 = vector.load %arg4[%20, %c0_5] : memref<8x128xf32, #tpu.memory_space<vmem>>, vector<1x128xf32>
    %22 = arith.addf %19, %21 : vector<1x128xf32>
    %c0_6 = arith.constant 0 : index
    %23 = arith.index_cast %c1_i32 : i32 to index
    %c0_7 = arith.constant 0 : index
    %24 = vector.load %arg5[%c0_6, %23, %c0_7] : memref<1x8x128xf32, #tpu.memory_space<vmem>>, vector<1x1x128xf32>
    %25 = vector.shape_cast %24 : vector<1x1x128xf32> to vector<1x128xf32>
    %26 = vector.shape_cast %22 : vector<1x128xf32> to vector<1x1x128xf32>
    tpu.vector_store %arg5[%c0_6, %23, %c0_7], %26 {strides = array<i32>} : memref<1x8x128xf32, #tpu.memory_space<vmem>>, vector<1x1x128xf32>,
    %c2_i32 = arith.constant 2 : i32
    %27 = arith.addi %2, %c2_i32 : i32
    %28 = arith.index_cast %27 : i32 to index
    %29 = memref.load %arg2[%28] : memref<16xi32, #tpu.memory_space<smem>>
    %30 = arith.index_cast %29 : i32 to index
    %c0_8 = arith.constant 0 : index
    %31 = vector.load %arg3[%30, %c0_8] : memref<64x128xf32, #tpu.memory_space<vmem>>, vector<1x128xf32>
    %32 = arith.index_cast %c2_i32 : i32 to index
    %c0_9 = arith.constant 0 : index
    %33 = vector.load %arg4[%32, %c0_9] : memref<8x128xf32, #tpu.memory_space<vmem>>, vector<1x128xf32>
    %34 = arith.addf %31, %33 : vector<1x128xf32>
    %c0_10 = arith.constant 0 : index
    %35 = arith.index_cast %c2_i32 : i32 to index
    %c0_11 = arith.constant 0 : index
    %36 = vector.load %arg5[%c0_10, %35, %c0_11] : memref<1x8x128xf32, #tpu.memory_space<vmem>>, vector<1x1x128xf32>
    %37 = vector.shape_cast %36 : vector<1x1x128xf32> to vector<1x128xf32>
    %38 = vector.shape_cast %34 : vector<1x128xf32> to vector<1x1x128xf32>
    tpu.vector_store %arg5[%c0_10, %35, %c0_11], %38 {strides = array<i32>} : memref<1x8x128xf32, #tpu.memory_space<vmem>>, vector<1x1x128xf32>,
    %c3_i32 = arith.constant 3 : i32
    %39 = arith.addi %2, %c3_i32 : i32
    %40 = arith.index_cast %39 : i32 to index
    %41 = memref.load %arg2[%40] : memref<16xi32, #tpu.memory_space<smem>>
    %42 = arith.index_cast %41 : i32 to index
    %c0_12 = arith.constant 0 : index
    %43 = vector.load %arg3[%42, %c0_12] : memref<64x128xf32, #tpu.memory_space<vmem>>, vector<1x128xf32>
    %44 = arith.index_cast %c3_i32 : i32 to index
    %c0_13 = arith.constant 0 : index
    %45 = vector.load %arg4[%44, %c0_13] : memref<8x128xf32, #tpu.memory_space<vmem>>, vector<1x128xf32>
    %46 = arith.addf %43, %45 : vector<1x128xf32>
    %c0_14 = arith.constant 0 : index
    %47 = arith.index_cast %c3_i32 : i32 to index
    %c0_15 = arith.constant 0 : index
    %48 = vector.load %arg5[%c0_14, %47, %c0_15] : memref<1x8x128xf32, #tpu.memory_space<vmem>>, vector<1x1x128xf32>
    %49 = vector.shape_cast %48 : vector<1x1x128xf32> to vector<1x128xf32>
    %50 = vector.shape_cast %46 : vector<1x128xf32> to vector<1x1x128xf32>
    tpu.vector_store %arg5[%c0_14, %47, %c0_15], %50 {strides = array<i32>} : memref<1x8x128xf32, #tpu.memory_space<vmem>>, vector<1x1x128xf32>,
    %c4_i32 = arith.constant 4 : i32
    %51 = arith.addi %2, %c4_i32 : i32
    %52 = arith.index_cast %51 : i32 to index
    %53 = memref.load %arg2[%52] : memref<16xi32, #tpu.memory_space<smem>>
    %54 = arith.index_cast %53 : i32 to index
    %c0_16 = arith.constant 0 : index
    %55 = vector.load %arg3[%54, %c0_16] : memref<64x128xf32, #tpu.memory_space<vmem>>, vector<1x128xf32>
    %56 = arith.index_cast %c4_i32 : i32 to index
    %c0_17 = arith.constant 0 : index
    %57 = vector.load %arg4[%56, %c0_17] : memref<8x128xf32, #tpu.memory_space<vmem>>, vector<1x128xf32>
    %58 = arith.addf %55, %57 : vector<1x128xf32>
    %c0_18 = arith.constant 0 : index
    %59 = arith.index_cast %c4_i32 : i32 to index
    %c0_19 = arith.constant 0 : index
    %60 = vector.load %arg5[%c0_18, %59, %c0_19] : memref<1x8x128xf32, #tpu.memory_space<vmem>>, vector<1x1x128xf32>
    %61 = vector.shape_cast %60 : vector<1x1x128xf32> to vector<1x128xf32>
    %62 = vector.shape_cast %58 : vector<1x128xf32> to vector<1x1x128xf32>
    tpu.vector_store %arg5[%c0_18, %59, %c0_19], %62 {strides = array<i32>} : memref<1x8x128xf32, #tpu.memory_space<vmem>>, vector<1x1x128xf32>,
    %c5_i32 = arith.constant 5 : i32
    %63 = arith.addi %2, %c5_i32 : i32
    %64 = arith.index_cast %63 : i32 to index
    %65 = memref.load %arg2[%64] : memref<16xi32, #tpu.memory_space<smem>>
    %66 = arith.index_cast %65 : i32 to index
    %c0_20 = arith.constant 0 : index
    %67 = vector.load %arg3[%66, %c0_20] : memref<64x128xf32, #tpu.memory_space<vmem>>, vector<1x128xf32>
    %68 = arith.index_cast %c5_i32 : i32 to index
    %c0_21 = arith.constant 0 : index
    %69 = vector.load %arg4[%68, %c0_21] : memref<8x128xf32, #tpu.memory_space<vmem>>, vector<1x128xf32>
    %70 = arith.addf %67, %69 : vector<1x128xf32>
    %c0_22 = arith.constant 0 : index
    %71 = arith.index_cast %c5_i32 : i32 to index
    %c0_23 = arith.constant 0 : index
    %72 = vector.load %arg5[%c0_22, %71, %c0_23] : memref<1x8x128xf32, #tpu.memory_space<vmem>>, vector<1x1x128xf32>
    %73 = vector.shape_cast %72 : vector<1x1x128xf32> to vector<1x128xf32>
    %74 = vector.shape_cast %70 : vector<1x128xf32> to vector<1x1x128xf32>
    tpu.vector_store %arg5[%c0_22, %71, %c0_23], %74 {strides = array<i32>} : memref<1x8x128xf32, #tpu.memory_space<vmem>>, vector<1x1x128xf32>,
    %c6_i32 = arith.constant 6 : i32
    %75 = arith.addi %2, %c6_i32 : i32
    %76 = arith.index_cast %75 : i32 to index
    %77 = memref.load %arg2[%76] : memref<16xi32, #tpu.memory_space<smem>>
    %78 = arith.index_cast %77 : i32 to index
    %c0_24 = arith.constant 0 : index
    %79 = vector.load %arg3[%78, %c0_24] : memref<64x128xf32, #tpu.memory_space<vmem>>, vector<1x128xf32>
    %80 = arith.index_cast %c6_i32 : i32 to index
    %c0_25 = arith.constant 0 : index
    %81 = vector.load %arg4[%80, %c0_25] : memref<8x128xf32, #tpu.memory_space<vmem>>, vector<1x128xf32>
    %82 = arith.addf %79, %81 : vector<1x128xf32>
    %c0_26 = arith.constant 0 : index
    %83 = arith.index_cast %c6_i32 : i32 to index
    %c0_27 = arith.constant 0 : index
    %84 = vector.load %arg5[%c0_26, %83, %c0_27] : memref<1x8x128xf32, #tpu.memory_space<vmem>>, vector<1x1x128xf32>
    %85 = vector.shape_cast %84 : vector<1x1x128xf32> to vector<1x128xf32>
    %86 = vector.shape_cast %82 : vector<1x128xf32> to vector<1x1x128xf32>
    tpu.vector_store %arg5[%c0_26, %83, %c0_27], %86 {strides = array<i32>} : memref<1x8x128xf32, #tpu.memory_space<vmem>>, vector<1x1x128xf32>,
    %c7_i32 = arith.constant 7 : i32
    %87 = arith.addi %2, %c7_i32 : i32
    %88 = arith.index_cast %87 : i32 to index
    %89 = memref.load %arg2[%88] : memref<16xi32, #tpu.memory_space<smem>>
    %90 = arith.index_cast %89 : i32 to index
    %c0_28 = arith.constant 0 : index
    %91 = vector.load %arg3[%90, %c0_28] : memref<64x128xf32, #tpu.memory_space<vmem>>, vector<1x128xf32>
    %92 = arith.index_cast %c7_i32 : i32 to index
    %c0_29 = arith.constant 0 : index
    %93 = vector.load %arg4[%92, %c0_29] : memref<8x128xf32, #tpu.memory_space<vmem>>, vector<1x128xf32>
    %94 = arith.addf %91, %93 : vector<1x128xf32>
    %c0_30 = arith.constant 0 : index
    %95 = arith.index_cast %c7_i32 : i32 to index
    %c0_31 = arith.constant 0 : index
    %96 = vector.load %arg5[%c0_30, %95, %c0_31] : memref<1x8x128xf32, #tpu.memory_space<vmem>>, vector<1x1x128xf32>
    %97 = vector.shape_cast %96 : vector<1x1x128xf32> to vector<1x128xf32>
    %98 = vector.shape_cast %94 : vector<1x128xf32> to vector<1x1x128xf32>
    tpu.vector_store %arg5[%c0_30, %95, %c0_31], %98 {strides = array<i32>} : memref<1x8x128xf32, #tpu.memory_space<vmem>>, vector<1x1x128xf32>,
    %c8_i32_32 = arith.constant 8 : i32
    return
  }
  func.func @transform_0(%arg0: i32, %arg1: i32, %arg2: memref<16xi32, #tpu.memory_space<smem>>) -> (i32, i32) {
    %c0_i32 = arith.constant 0 : i32
    %c0_i32_0 = arith.constant 0 : i32
    %c0_i32_1 = arith.constant 0 : i32
    return %c0_i32, %c0_i32_0 : i32, i32
  }
  func.func @transform_1(%arg0: i32, %arg1: i32, %arg2: memref<16xi32, #tpu.memory_space<smem>>) -> (i32, i32) {
    %c0_i32 = arith.constant 0 : i32
    %c0_i32_0 = arith.constant 0 : i32
    return %arg0, %c0_i32 : i32, i32
  }
  func.func @transform_2(%arg0: i32, %arg1: i32, %arg2: memref<16xi32, #tpu.memory_space<smem>>) -> (i32, i32, i32) {
    %c0_i32 = arith.constant 0 : i32
    %c0_i32_0 = arith.constant 0 : i32
    return %arg1, %arg0, %c0_i32 : i32, i32, i32
  }
}

</mosaic_0001>

<llo_original>
// kernel: tpu_custom_call.1
$region0: #{tpu_custom_call.1}
  #allocation0 [shape = 'u32[]', space=smem, size = 0x4, offset = 0x4, fixed_abs, tag = 'smem constant byte address 0x4 - core index']
  #allocation1 [shape = 'u32[144,128]{1,0:T(1,128)}', space=vmem, size = 0x12000, scoped, tag = 'internal scratch']
  #allocation2 [shape = 's32[1]{0}', space=sflag, size = 0x4, scoped, tag = 'scoped memory for tpu_custom_call.1']
  #allocation3 [shape = 'u8[512]{0}', space=smem, size = 0x200, scoped, tag = 'prefetched SMEM operand 0']
  %s0 = inlined_call_operand.hbm [shape: s32[16], index: 0, kind: input, shape index: {}]
  %s1 = inlined_call_operand.hbm [shape: f32[64,128], index: 1, kind: input, shape index: {}]
  %s2 = inlined_call_operand.hbm [shape: f32[8,128], index: 2, kind: input, shape index: {}]
  %s3 = inlined_call_operand.hbm [shape: f32[2,8,128], index: 3, kind: output, shape index: {}]
  %s4 = sld [smem:[#allocation0]]
  $region49: #{tpu_custom_call.1} parent=0
    _
  %s6 = ssub.s32 1, %s4
  %s7 = scalar_select 0, %s6, %s4
  %9 = dma.hbm_to_smem %s0, 16, [#allocation3], [#allocation2]
  %10 = dma.done [#allocation2], 16
  %11 = sfence
  $region1: #{tpu_custom_call.1} parent=0
    #allocation4 [shape = 'u8[32768]{0}', space=vmem, size = 0x8000, scoped, tag = 'input window, operand 1, single buffered']
    #allocation5 [shape = 's32[2]{0}', space=sflag, size = 0x8, scoped, tag = 'scoped memory for tpu_custom_call.1']
    #allocation6 [shape = 's32[2]{0}', space=sflag, size = 0x8, scoped, tag = 'scoped memory for tpu_custom_call.1']
    #allocation7 [shape = 'u8[4096]{0}', space=vmem, size = 0x1000, scoped, tag = 'input window, operand 2, single buffered']
    #allocation8 [shape = 's32[1]{0}', space=sflag, size = 0x4, scoped, tag = 'scoped memory for tpu_custom_call.1']
    #allocation9 [shape = 'u8[8192]{0}', space=vmem, size = 0x2000, scoped, tag = 'output window, operand 0']
    %12 = vsyncpa [#allocation5], 0
    %13 = vsyncpa [#allocation8], 0
    %14 = vsyncpa [#allocation6], 0
    %s15 = scalar_lea.sflag [#allocation6], 1
    %16 = vsyncpa %s15, 0
    loop: start=0, step=1, limit=4
    $region2: #{tpu_custom_call.1} parent=1 // loop_pre_header
      _
    $region3: #{tpu_custom_call.1} parent=1 // loop_header
      %s18 = sphi 0, %s22
      %p19 = scmp.ge.s32.totalorder %s18, 4
      %s25 = sphi 0, %s37
      %s26 = sphi 0, %s33
      %s27 = sphi 0, %s25
      %s28 = sphi 0, %s26
      %s29 = sphi 0, %s27
      %s30 = sphi 0, %s28
      %s38 = sphi 0, %s38
      %s40 = sphi 0, %s38
      %s41 = sphi 0, %s40
      %s55 = sphi 0, %s41
      %s61 = sphi 0, %s63
      %s64 = sphi 0, %s61
      %s65 = sphi 0, %s64
      %s81 = sphi 0, %s65
      %s89 = sphi 0, %s91
      %s92 = sphi 0, %s89
      %s93 = sphi 0, %s92
      %s109 = sphi 0, %s93
    $region4: #{tpu_custom_call.1} parent=1 // loop_header_branch
      %21 = sbr.rel (%p19) target = $region8
    $region5: #{tpu_custom_call.1} parent=1 // loop_body
      %s23 = ssub.s32 %s18, 1
      %s24 = ssub.s32 %s18, 2
      %s31 = sadd.s32 1, %s26
      %p32 = scmp.ge.s32.totalorder %s31, 2
      %s33 = scalar_select %p32, 0, %s31
      %s34 = sadd.s32 1, %s25
      %s35 = scalar_select %p32, %s34, %s25
      %p36 = scmp.ge.s32.totalorder %s35, 1
      %s37 = scalar_select %p36, 0, %s35
      %s39 = sadd.s32 %s38, 1
      %p42 = scmp.eq.s32.totalorder %s18, 1
      %p43 = scmp.ne.s32.totalorder %s38, %s40
      %p44 = scmp.eq.s32.totalorder %s18, 0
      %p45 = por %p43, %p44
      %p46 = scmp.ne.s32.totalorder %s38, %s40
      %p47 = scmp.eq.s32.totalorder %s23, 1
      %p48 = por %p46, %p47
      %p49 = scmp.ne.s32.totalorder %s40, %s41
      %p50 = scmp.eq.s32.totalorder %s23, 0
      %p51 = por %p49, %p50
      %p52 = scmp.ne.s32.totalorder %s40, %s41
      %p53 = scmp.eq.s32.totalorder %s24, 1
      %p54 = por %p52, %p53
      %p56 = scmp.ne.s32.totalorder %s41, %s55
      %p57 = scmp.eq.s32.totalorder %s24, 0
      %p58 = por %p56, %p57
      %s59 = ssub.s32 %s25, %s37
      %p60 = scmp.eq.s32.totalorder %s59, 0
      %s62 = sadd.s32 %s61, 1
      %s63 = scalar_select %p60, %s61, %s62
      %p66 = pneg %p60
      %p67 = scmp.eq.s32.totalorder %s18, 1
      %p68 = por %p66, %p67
      %p69 = scmp.ne.s32.totalorder %s61, %s64
      %p70 = scmp.eq.s32.totalorder %s18, 0
      %p71 = por %p69, %p70
      %p72 = scmp.ne.s32.totalorder %s61, %s64
      %p73 = scmp.eq.s32.totalorder %s23, 1
      %p74 = por %p72, %p73
      %p75 = scmp.ne.s32.totalorder %s64, %s65
      %p76 = scmp.eq.s32.totalorder %s23, 0
      %p77 = por %p75, %p76
      %p78 = scmp.ne.s32.totalorder %s64, %s65
      %p79 = scmp.eq.s32.totalorder %s24, 1
      %p80 = por %p78, %p79
      %p82 = scmp.ne.s32.totalorder %s65, %s81
      %p83 = scmp.eq.s32.totalorder %s24, 0
      %p84 = por %p82, %p83
      %s85 = ssub.s32 %s26, %s33
      %s86 = ssub.s32 %s25, %s37
      %s87 = sor.u32 %s85, %s86
      %p88 = scmp.eq.s32.totalorder %s87, 0
      %s90 = sadd.s32 %s89, 1
      %s91 = scalar_select %p88, %s89, %s90
      %p94 = pneg %p88
      %p95 = scmp.eq.s32.totalorder %s18, 1
      %p96 = por %p94, %p95
      %p97 = scmp.ne.s32.totalorder %s89, %s92
      %p98 = scmp.eq.s32.totalorder %s18, 0
      %p99 = por %p97, %p98
      %p100 = scmp.ne.s32.totalorder %s89, %s92
      %p101 = scmp.eq.s32.totalorder %s23, 1
      %p102 = por %p100, %p101
      %p103 = scmp.ne.s32.totalorder %s92, %s93
      %p104 = scmp.eq.s32.totalorder %s23, 0
      %p105 = por %p103, %p104
      %p106 = scmp.ne.s32.totalorder %s92, %s93
      %p107 = scmp.eq.s32.totalorder %s24, 1
      %p108 = por %p106, %p107
      %p110 = scmp.ne.s32.totalorder %s93, %s109
      %p111 = scmp.eq.s32.totalorder %s24, 0
      %p112 = por %p110, %p111
      %p113 = scmp.le.s32.totalorder 1, %s18
      %p114 = scmp.lt.s32.totalorder %s18, 3
      %p115 = pnand %p113, %p114
      %p116 = pneg %p115
      // Predicated region
      $region9: #{tpu_custom_call.1} parent=5 // pred_check
        _
      $region10: #{tpu_custom_call.1} parent=5 // pred_check_branch
        %118 = sbr.rel (%p115) target = $region12
      $region11: #{tpu_custom_call.1} parent=5 // pred_region
        %s119 = ssub.s32 %s18, 1
        // Predicated region
        $region13: #{tpu_custom_call.1} parent=11 // pred_check
          %p120 = pneg %p51
        $region14: #{tpu_custom_call.1} parent=11 // pred_check_branch
          %122 = sbr.rel (%p120) target = $region16
        $region15: #{tpu_custom_call.1} parent=11 // pred_region
          %s124 = ssub.s32 1024, 1024
          %125 = vsyncadd [#allocation5], %s124
          %s126 = sshll.u32 [#allocation4], 4
          %s127 = int_to_ptr.vmem [resolvable:$true] %s126
          %132 = dma.hbm_to_vmem [thread:$0]  %s1, 1024, %s127, [#allocation5], 128, 128, 8
        $region16: #{tpu_custom_call.1} parent=11 // pred_fallthru
          _
        // Predicated region
        $region17: #{tpu_custom_call.1} parent=11 // pred_check
          %p133 = pneg %p77
        $region18: #{tpu_custom_call.1} parent=11 // pred_check_branch
          %135 = sbr.rel (%p133) target = $region20
        $region19: #{tpu_custom_call.1} parent=11 // pred_region
          %s137 = ssub.s32 128, 128
          %138 = vsyncadd [#allocation8], %s137
          %s139 = smul.addr %s27, 128
          %s140 = scalar_lea.hbm %s2, %s139
          %s142 = sshll.u32 [#allocation7], 4
          %s143 = int_to_ptr.vmem [resolvable:$true] %s142
          %145 = dma.hbm_to_vmem [thread:$0]  %s140, 128, %s143, [#allocation8]
        $region20: #{tpu_custom_call.1} parent=11 // pred_fallthru
          _
      $region12: #{tpu_custom_call.1} parent=5 // pred_fallthru
        _
      %p146 = scmp.lt.s32.totalorder %s18, 2
      // Predicated region
      $region21: #{tpu_custom_call.1} parent=5 // pred_check
        %p147 = pneg %p146
      $region22: #{tpu_custom_call.1} parent=5 // pred_check_branch
        %149 = sbr.rel (%p147) target = $region24
      $region23: #{tpu_custom_call.1} parent=5 // pred_region
        _
      $region24: #{tpu_custom_call.1} parent=5 // pred_fallthru
        _
      %p150 = scmp.le.s32.totalorder 1, %s18
      %p151 = scmp.lt.s32.totalorder %s18, 3
      %p152 = pnand %p150, %p151
      %p153 = pneg %p152
      // Predicated region
      $region25: #{tpu_custom_call.1} parent=5 // pred_check
        _
      $region26: #{tpu_custom_call.1} parent=5 // pred_check_branch
        %155 = sbr.rel (%p152) target = $region28
      $region27: #{tpu_custom_call.1} parent=5 // pred_region
        %s156 = ssub.s32 %s18, 1
        // Predicated region
        $region29: #{tpu_custom_call.1} parent=27 // pred_check
          %p157 = pneg %p51
        $region30: #{tpu_custom_call.1} parent=27 // pred_check_branch
          %159 = sbr.rel (%p157) target = $region32
        $region31: #{tpu_custom_call.1} parent=27 // pred_region
          %160 = dma.done [#allocation5], 1024
        $region32: #{tpu_custom_call.1} parent=27 // pred_fallthru
          _
        // Predicated region
        $region33: #{tpu_custom_call.1} parent=27 // pred_check
          %p161 = pneg %p77
        $region34: #{tpu_custom_call.1} parent=27 // pred_check_branch
          %163 = sbr.rel (%p161) target = $region36
        $region35: #{tpu_custom_call.1} parent=27 // pred_region
          %164 = dma.done [#allocation8], 128
        $region36: #{tpu_custom_call.1} parent=27 // pred_fallthru
          _
        %p165 = pneg %p51
        %p166 = pneg %p48
        %p167 = pneg %p77
        %p168 = pneg %p74
        %p169 = pneg %p105
        %p170 = pneg %p102
        %s171 = sand.u32 %s92, 1
        %s172 = scalar_lea.sflag [#allocation6], %s171
        %s173 = sand.u32 %s92, 1
        %s174 = smul.addr %s173, 8
        %s175 = scalar_lea.vmem [#allocation9], %s174
        %s176 = smul.u32 %s28, 8
        %s177 = smul.u32 %s27, 8
        %s178 = sadd.s32 %s176, %s177
        %s179 = sld [smem:[#allocation3 + %s178]]
        %s180 = scalar_lea.vmem [#allocation4], %s179
        %v181 = vld [vmem:[%s180] sm:$0x1]
        %v182 = vld [vmem:[#allocation7] sm:$0x1]
        %v183 = vadd.f32 %v181, %v182
        %184 = vst [vmem:[%s175] sm:$0x1] %v183
        %s185 = sadd.s32 %s178, 1
        %s186 = sld [smem:[#allocation3 + %s185]]
        %s187 = scalar_lea.vmem [#allocation4], %s186
        %v188 = vld [vmem:[%s187] sm:$0x1]
        %v189 = vld [vmem:[#allocation7 + $0x1] sm:$0x1]
        %v190 = vadd.f32 %v188, %v189
        %191 = vst [vmem:[%s175 + $0x1] sm:$0x1] %v190
        %s192 = sadd.s32 %s178, 2
        %s193 = sld [smem:[#allocation3 + %s192]]
        %s194 = scalar_lea.vmem [#allocation4], %s193
        %v195 = vld [vmem:[%s194] sm:$0x1]
        %v196 = vld [vmem:[#allocation7 + $0x2] sm:$0x1]
        %v197 = vadd.f32 %v195, %v196
        %198 = vst [vmem:[%s175 + $0x2] sm:$0x1] %v197
        %s199 = sadd.s32 %s178, 3
        %s200 = sld [smem:[#allocation3 + %s199]]
        %s201 = scalar_lea.vmem [#allocation4], %s200
        %v202 = vld [vmem:[%s201] sm:$0x1]
        %v203 = vld [vmem:[#allocation7 + $0x3] sm:$0x1]
        %v204 = vadd.f32 %v202, %v203
        %205 = vst [vmem:[%s175 + $0x3] sm:$0x1] %v204
        %s206 = sadd.s32 %s178, 4
        %s207 = sld [smem:[#allocation3 + %s206]]
        %s208 = scalar_lea.vmem [#allocation4], %s207
        %v209 = vld [vmem:[%s208] sm:$0x1]
        %v210 = vld [vmem:[#allocation7 + $0x4] sm:$0x1]
        %v211 = vadd.f32 %v209, %v210
        %212 = vst [vmem:[%s175 + $0x4] sm:$0x1] %v211
        %s213 = sadd.s32 %s178, 5
        %s214 = sld [smem:[#allocation3 + %s213]]
        %s215 = scalar_lea.vmem [#allocation4], %s214
        %v216 = vld [vmem:[%s215] sm:$0x1]
        %v217 = vld [vmem:[#allocation7 + $0x5] sm:$0x1]
        %v218 = vadd.f32 %v216, %v217
        %219 = vst [vmem:[%s175 + $0x5] sm:$0x1] %v218
        %s220 = sadd.s32 %s178, 6
        %s221 = sld [smem:[#allocation3 + %s220]]
        %s222 = scalar_lea.vmem [#allocation4], %s221
        %v223 = vld [vmem:[%s222] sm:$0x1]
        %v224 = vld [vmem:[#allocation7 + $0x6] sm:$0x1]
        %v225 = vadd.f32 %v223, %v224
        %226 = vst [vmem:[%s175 + $0x6] sm:$0x1] %v225
        %s227 = sadd.s32 %s178, 7
        %s228 = sld [smem:[#allocation3 + %s227]]
        %s229 = scalar_lea.vmem [#allocation4], %s228
        %v230 = vld [vmem:[%s229] sm:$0x1]
        %v231 = vld [vmem:[#allocation7 + $0x7] sm:$0x1]
        %v232 = vadd.f32 %v230, %v231
        %233 = vst [vmem:[%s175 + $0x7] sm:$0x1] %v232
        %s234 = sand.u32 %s92, 1
        %s235 = scalar_lea.sflag [#allocation6], %s234
        %s236 = sand.u32 %s92, 1
        %s237 = smul.addr %s236, 8
        %s238 = scalar_lea.vmem [#allocation9], %s237
        // Predicated region
        $region37: #{tpu_custom_call.1} parent=27 // pred_check
          %p239 = pneg %p102
        $region38: #{tpu_custom_call.1} parent=27 // pred_check_branch
          %241 = sbr.rel (%p239) target = $region40
        $region39: #{tpu_custom_call.1} parent=27 // pred_region
          %s243 = ssub.s32 128, 128
          %244 = vsyncadd %s235, %s243
          %s245 = sadd.s32 %s27, %s28
          %s246 = smul.addr %s245, 128
          %s247 = scalar_lea.hbm %s3, %s246
          %s249 = sshll.u32 %s238, 4
          %s250 = int_to_ptr.vmem [resolvable:$true] %s249
          %252 = dma.vmem_to_hbm [thread:$0]  %s250, 128, %s247, %s235
        $region40: #{tpu_custom_call.1} parent=27 // pred_fallthru
          _
      $region28: #{tpu_custom_call.1} parent=5 // pred_fallthru
        _
      %p253 = scmp.le.s32.totalorder 2, %s18
      // Predicated region
      $region41: #{tpu_custom_call.1} parent=5 // pred_check
        %p254 = pneg %p253
      $region42: #{tpu_custom_call.1} parent=5 // pred_check_branch
        %256 = sbr.rel (%p254) target = $region44
      $region43: #{tpu_custom_call.1} parent=5 // pred_region
        %s257 = ssub.s32 %s18, 2
        // Predicated region
        $region45: #{tpu_custom_call.1} parent=43 // pred_check
          %p258 = pneg %p108
        $region46: #{tpu_custom_call.1} parent=43 // pred_check_branch
          %260 = sbr.rel (%p258) target = $region48
        $region47: #{tpu_custom_call.1} parent=43 // pred_region
          %s261 = sand.u32 %s93, 1
          %s262 = scalar_lea.sflag [#allocation6], %s261
          %s263 = sand.u32 %s93, 1
          %s264 = smul.addr %s263, 8
          %s265 = scalar_lea.vmem [#allocation9], %s264
          %266 = dma.done %s262, 128
        $region48: #{tpu_custom_call.1} parent=43 // pred_fallthru
          _
      $region44: #{tpu_custom_call.1} parent=5 // pred_fallthru
        _
    $region6: #{tpu_custom_call.1} parent=1 // loop_footer
      %s22 = sadd.s32 1, %s18
    $region7: #{tpu_custom_call.1} parent=1 // loop_footer_branch
      %17 = sbr.rel target = $region3
    $region8: #{tpu_custom_call.1} parent=1 // loop_exit
      _
    %267 = vsyncpa [#allocation5], 1
    %s268 = scalar_lea.sflag [#allocation5], 1
    %269 = vsyncpa %s268, 1
    %270 = vsyncpa [#allocation8], 1
    %271 = vsyncpa [#allocation6], 1
    %s272 = scalar_lea.sflag [#allocation6], 1
    %273 = vsyncpa %s272, 1

</llo_original>
